<compile_context>
chip_gen: v7x
topology: tpu7x:2x2x1
jax: 0.10.0
libtpu: 0.0.40
codegen_flags: <defaults>
</compile_context>

<pallas_src>
import jax
import jax.numpy as jnp
from jax.experimental import pallas as pl
from jax.experimental.pallas import tpu as pltpu

LN_EPS = 1e-5


def _aggregate_kernel(ctx_ref, red_ref, out_ref):
    # ctx_ref : (Bt, L, D) block of context (original dtype)
    # red_ref : (D, 2) f32 reduction matrix: col 0 = 1/D, col 1 = gamma*w - mean(gamma*w)
    # out_ref : (Bt, D) output block
    bt, L, D = ctx_ref.shape
    xf = ctx_ref[...].astype(jnp.float32)                      # (Bt, L, D)

    # One MXU pass produces both linear lane-reductions over D:
    #   col 0 -> mean_d(x), col 1 -> dot(x, gw_c) == folded LayerNorm+Linear numerator.
    mx = jnp.dot(
        xf.reshape(bt * L, D), red_ref[...],
        preferred_element_type=jnp.float32,
        precision=jax.lax.Precision.HIGHEST,
    ).reshape(bt, L, 2)
    mean = mx[..., 0:1]                                        # (Bt, L, 1)
    xw_c = mx[..., 1:2]                                        # (Bt, L, 1)

    # Centered (two-pass) variance, exactly matching nn.LayerNorm.
    xc = xf - mean                                             # (Bt, L, D)
    var = jnp.mean(xc * xc, axis=-1, keepdims=True)            # (Bt, L, 1)
    inv_std = jax.lax.rsqrt(var + LN_EPS)                      # (Bt, L, 1)

    # score = w . (gamma*(x-mean)*inv_std + beta) up to a softmax-invariant constant.
    score = inv_std * xw_c                                     # (Bt, L, 1)

    # Dropout: identity (eval mode).
    # Max-stabilized softmax over the sequence axis (dim=1).
    m = jnp.max(score, axis=1, keepdims=True)                  # (Bt, 1, 1)
    p = jnp.exp(score - m)                                     # (Bt, L, 1)
    denom = jnp.sum(p, axis=1)                                 # (Bt, 1)

    # bmm(context^T, softmax(score)) == (sum_L p * x) / denom.
    acc = jnp.sum(p * xf, axis=1)                              # (Bt, D)
    out_ref[...] = (acc / denom).astype(out_ref.dtype)         # exact divide (no approx recip)


def _num_tensorcores():
    """2 TensorCores per chip on v7x; 1 on v5e/v6e. Defaults to 1 if unknown."""
    try:
        kind = jax.devices()[0].device_kind.lower()
        if "v7" in kind:
            return 2
    except Exception:
        pass
    return 1


def _pick_block_b(B, L, D, itemsize, num_cores):
    """Largest divisor of B whose per-grid-step VMEM working set stays under a
    conservative 16 MiB budget (safe even under v5e's 16 MiB default scoped
    VMEM; vmem_limit_bytes=32 MiB is passed explicitly for headroom).

    The budget accounts for:
      * the double-buffered input tile            -> 2 * itemsize  bytes/elem
      * the in-kernel f32 working set (xf, the centered temp, fused products)
                                                   -> ~12          bytes/elem
    using lane/sublane-padded tile dims (D padded to 128, L padded to the
    dtype's sublane packing), since that is what VMEM actually holds.

    When >1 TensorCore is available (v7x) the tile is additionally capped at
    ceil(B/num_cores) so dimension_semantics=('parallel',) gives every core
    at least one grid step; on single-core chips (v5e/v6e) the slab grows to
    the VMEM budget (no pointless halving / extra per-step overhead)."""
    lane = 128
    sub = 8 * max(1, 4 // itemsize)                      # sublane packing for narrow dtypes
    l_pad = ((L + sub - 1) // sub) * sub
    d_pad = ((D + lane - 1) // lane) * lane
    per_batch_elems = max(1, l_pad * d_pad)
    bytes_per_elem = 2 * itemsize + 12
    budget = 16 * 1024 * 1024
    bt_cap = max(1, budget // (per_batch_elems * bytes_per_elem))
    if num_cores > 1 and B >= 2:
        bt_cap = min(bt_cap, max(1, -(-B // num_cores)))  # ceil(B / num_cores)
    bt_cap = int(min(bt_cap, B))
    for bt in range(bt_cap, 0, -1):
        if B % bt == 0:
            return bt
    return 1


def aggregate_layer(context, ln_gamma, ln_beta, fc_weight, block_b=None):
    """context: (B, L, D); ln_gamma/ln_beta: (D,); fc_weight: (1, D) or (D,).

    ln_beta is accepted for interface parity with nn.LayerNorm but never enters
    the kernel: it only adds a per-sequence constant to the pre-softmax score
    (softmax-invariant), and the weighted sum uses the raw context.
    """
    B, L, D = context.shape
    del ln_beta  # softmax-invariant constant; see docstring.

    # Fold LayerNorm(gamma) + Linear(D->1) and center, so the kernel only needs
    # one (D, 2) matrix: col 0 recovers the mean, col 1 the score numerator.
    gw = ln_gamma.reshape(-1).astype(jnp.float32) * fc_weight.reshape(-1).astype(jnp.float32)
    gw_c = gw - jnp.mean(gw)                                   # hoisted sum(gamma*w) correction
    red = jnp.stack([jnp.full((D,), 1.0 / D, jnp.float32), gw_c], axis=1)   # (D, 2)

    if block_b is None:
        block_b = _pick_block_b(B, L, D, jnp.dtype(context.dtype).itemsize,
                                _num_tensorcores())
    if block_b <= 0 or B % block_b != 0:
        raise ValueError(f"block_b={block_b} must be a positive divisor of B={B}")

    out = pl.pallas_call(
        _aggregate_kernel,
        out_shape=jax.ShapeDtypeStruct((B, D), context.dtype),
        grid_spec=pltpu.PrefetchScalarGridSpec(
            num_scalar_prefetch=0,
            grid=(B // block_b,),
            in_specs=[
                pl.BlockSpec((block_b, L, D), lambda b: (b, 0, 0)),
                pl.BlockSpec((D, 2), lambda b: (0, 0)),
            ],
            out_specs=pl.BlockSpec((block_b, D), lambda b: (b, 0)),
        ),
        compiler_params=pltpu.CompilerParams(
            dimension_semantics=("parallel",),
            vmem_limit_bytes=32 * 1024 * 1024,
        ),
    )(context, red)
    return out


def _reference(context, ln_gamma, ln_beta, fc_weight):
    # Unfolded reference, matching the PyTorch module exactly (incl. beta).
    x = context.astype(jnp.float32)
    mean = jnp.mean(x, axis=-1, keepdims=True)
    var = jnp.mean((x - mean) ** 2, axis=-1, keepdims=True)
    normed = (x - mean) / jnp.sqrt(var + LN_EPS)
    y = normed * ln_gamma + ln_beta
    score = jnp.einsum("bld,d->bl", y, fc_weight.reshape(-1))[..., None]   # (B,L,1)
    attn = jax.nn.softmax(score, axis=1)                                   # (B,L,1)
    out = jnp.einsum("bld,blo->bdo", x, attn)[..., 0]                      # (B,D)
    return out.astype(context.dtype)


if __name__ == "__main__":
    key = jax.random.PRNGKey(0)
    B, L, D = 2, 8, 32  # batch, seq, d_model

    k_ctx, k_w, k_g, k_b = jax.random.split(key, 4)
    context = jax.random.normal(k_ctx, (B, L, D), dtype=jnp.float32)

    # Non-trivial LayerNorm affine params so the gamma-fold / beta-invariance is exercised.
    ln_gamma = 1.0 + 0.1 * jax.random.normal(k_g, (D,), dtype=jnp.float32)
    ln_beta = 0.1 * jax.random.normal(k_b, (D,), dtype=jnp.float32)
    bound = 1.0 / (D ** 0.5)
    fc_weight = jax.random.uniform(k_w, (1, D), dtype=jnp.float32,
                                   minval=-bound, maxval=bound)

    out = aggregate_layer(context, ln_gamma, ln_beta, fc_weight)
    out = jax.block_until_ready(out)

    ref = _reference(context, ln_gamma, ln_beta, fc_weight)
    assert out.shape == (B, D)
    err = float(jnp.max(jnp.abs(out.astype(jnp.float32) - ref.astype(jnp.float32))))
    assert err < 1e-4, err

    print("KERNEL_OK")
</pallas_src>

<mosaic_0001>
module attributes {stable_mosaic.version = 11 : i64} {
  func.func @_aggregate_kernel(%arg0: i32, %arg1: memref<2x8x32xf32, #tpu.memory_space<vmem>>, %arg2: memref<32x2xf32, #tpu.memory_space<vmem>>, %arg3: memref<2x32xf32, #tpu.memory_space<vmem>>) attributes {dimension_semantics = [#tpu.dimension_semantics<parallel>], iteration_bounds = array<i64: 1>, scalar_prefetch = 0 : i64, scratch_operands = 0 : i64, tpu.core_type = #tpu.core_type<tc>, window_params = [{transform_indices = @transform_0, window_bounds = array<i64: 2, 8, 32>}, {pipeline_mode = #tpu.pipeline_mode<synchronous>, transform_indices = @transform_1, window_bounds = array<i64: 32, 2>}, {transform_indices = @transform_2, window_bounds = array<i64: 2, 32>}]} {
    %c0 = arith.constant 0 : index
    %c0_0 = arith.constant 0 : index
    %c0_1 = arith.constant 0 : index
    %0 = vector.load %arg1[%c0, %c0_0, %c0_1] : memref<2x8x32xf32, #tpu.memory_space<vmem>>, vector<2x8x32xf32>
    %1 = vector.shape_cast %0 : vector<2x8x32xf32> to vector<16x32xf32>
    %c0_2 = arith.constant 0 : index
    %c0_3 = arith.constant 0 : index
    %2 = vector.load %arg2[%c0_2, %c0_3] : memref<32x2xf32, #tpu.memory_space<vmem>>, vector<32x2xf32>
    %cst = arith.constant dense<0.000000e+00> : vector<16x2xf32>
    %3 = tpu.matmul %1, %2, %cst {dimension_numbers = #tpu.dot_dimension_numbers<[1], [0], [0], [1], [0, 0, 1, 1], [], []>, precision = #tpu.contract_precision<fp32>} : vector<16x32xf32>, vector<32x2xf32>, vector<16x2xf32> -> vector<16x2xf32>
    %4 = vector.shape_cast %3 : vector<16x2xf32> to vector<2x8x2xf32>
    %5 = vector.extract_strided_slice %4 {offsets = [0, 0, 0], sizes = [2, 8, 1], strides = [1, 1, 1]} : vector<2x8x2xf32> to vector<2x8x1xf32>
    %6 = vector.extract_strided_slice %4 {offsets = [0, 0, 1], sizes = [2, 8, 1], strides = [1, 1, 1]} : vector<2x8x2xf32> to vector<2x8x1xf32>
    %7 = vector.broadcast %5 : vector<2x8x1xf32> to vector<2x8x32xf32>
    %8 = arith.subf %0, %7 : vector<2x8x32xf32>
    %9 = arith.mulf %8, %8 : vector<2x8x32xf32>
    %cst_4 = arith.constant dense<0.000000e+00> : vector<2x8xf32>
    %10 = vector.multi_reduction <add>, %9, %cst_4 [2] : vector<2x8x32xf32> to vector<2x8xf32>
    %11 = vector.shape_cast %10 : vector<2x8xf32> to vector<2x8x1xf32>
    %cst_5 = arith.constant 3.200000e+01 : f32
    %12 = vector.broadcast %cst_5 : f32 to vector<2x8x1xf32>
    %13 = arith.divf %11, %12 : vector<2x8x1xf32>
    %cst_6 = arith.constant 9.99999974E-6 : f32
    %14 = vector.broadcast %cst_6 : f32 to vector<2x8x1xf32>
    %15 = arith.addf %13, %14 : vector<2x8x1xf32>
    %16 = math.rsqrt %15 : vector<2x8x1xf32>
    %17 = arith.mulf %16, %6 : vector<2x8x1xf32>
    %cst_7 = arith.constant dense<0xFF800000> : vector<2x1xf32>
    %18 = vector.multi_reduction <maximumf>, %17, %cst_7 [1] : vector<2x8x1xf32> to vector<2x1xf32>
    %19 = vector.shape_cast %18 : vector<2x1xf32> to vector<2x1x1xf32>
    %20 = vector.broadcast %19 : vector<2x1x1xf32> to vector<2x8x1xf32>
    %21 = arith.subf %17, %20 : vector<2x8x1xf32>
    %22 = math.exp %21 : vector<2x8x1xf32>
    %cst_8 = arith.constant dense<0.000000e+00> : vector<2x1xf32>
    %23 = vector.multi_reduction <add>, %22, %cst_8 [1] : vector<2x8x1xf32> to vector<2x1xf32>
    %24 = vector.broadcast %22 : vector<2x8x1xf32> to vector<2x8x32xf32>
    %25 = arith.mulf %24, %0 : vector<2x8x32xf32>
    %cst_9 = arith.constant dense<0.000000e+00> : vector<2x32xf32>
    %26 = vector.multi_reduction <add>, %25, %cst_9 [1] : vector<2x8x32xf32> to vector<2x32xf32>
    %27 = vector.broadcast %23 : vector<2x1xf32> to vector<2x32xf32>
    %28 = arith.divf %26, %27 : vector<2x32xf32>
    %c0_10 = arith.constant 0 : index
    %c0_11 = arith.constant 0 : index
    %29 = vector.load %arg3[%c0_10, %c0_11] : memref<2x32xf32, #tpu.memory_space<vmem>>, vector<2x32xf32>
    tpu.vector_store %arg3[%c0_10, %c0_11], %28 {strides = array<i32>} : memref<2x32xf32, #tpu.memory_space<vmem>>, vector<2x32xf32>,
    return
  }
  func.func @transform_0(%arg0: i32) -> (i32, i32, i32) {
    %c0_i32 = arith.constant 0 : i32
    %c0_i32_0 = arith.constant 0 : i32
    %c0_i32_1 = arith.constant 0 : i32
    return %arg0, %c0_i32, %c0_i32_0 : i32, i32, i32
  }
  func.func @transform_1(%arg0: i32) -> (i32, i32) {
    %c0_i32 = arith.constant 0 : i32
    %c0_i32_0 = arith.constant 0 : i32
    %c0_i32_1 = arith.constant 0 : i32
    return %c0_i32, %c0_i32_0 : i32, i32
  }
  func.func @transform_2(%arg0: i32) -> (i32, i32) {
    %c0_i32 = arith.constant 0 : i32
    %c0_i32_0 = arith.constant 0 : i32
    return %arg0, %c0_i32 : i32, i32
  }
}

</mosaic_0001>

<llo_original>
// kernel: tpu_custom_call.1
$region0: #{tpu_custom_call.1}
  #allocation0 [shape = 'u32[]', space=smem, size = 0x4, offset = 0x4, fixed_abs, tag = 'smem constant byte address 0x4 - core index']
  #allocation1 [shape = 'u32[144,128]{1,0:T(1,128)}', space=vmem, size = 0x12000, scoped, tag = 'internal scratch']
  %s0 = inlined_call_operand.vmem [shape: f32[2,8,32], index: 0, kind: input, shape index: {}]
  %s1 = inlined_call_operand.vmem [shape: f32[32,2], index: 1, kind: input, shape index: {}]
  %s2 = inlined_call_operand.hbm [shape: f32[2,32], index: 2, kind: output, shape index: {}]
  %s3 = sld [smem:[#allocation0]]
  $region18: #{tpu_custom_call.1} parent=0
    _
  %s5 = ssub.s32 1, %s3
  %s6 = scalar_select 0, %s5, %s3
  $region1: #{tpu_custom_call.1} parent=0
    #allocation2 [shape = 'u8[1024]{0}', space=vmem, size = 0x400, scoped, tag = 'output window, operand 0, single buffered']
    #allocation3 [shape = 's32[1]{0}', space=sflag, size = 0x4, scoped, tag = 'scoped memory for tpu_custom_call.1']
    %7 = vsyncpa [#allocation3], 0
    // Predicated region
    $region2: #{tpu_custom_call.1} parent=1 // pred_check
      _
    $region3: #{tpu_custom_call.1} parent=1 // pred_check_branch
      %9 = sbr.rel (0) target = $region5
    $region4: #{tpu_custom_call.1} parent=1 // pred_region
      _
    $region5: #{tpu_custom_call.1} parent=1 // pred_fallthru
      _
    // Predicated region
    $region6: #{tpu_custom_call.1} parent=1 // pred_check
      _
    $region7: #{tpu_custom_call.1} parent=1 // pred_check_branch
      %11 = sbr.rel (0) target = $region9
    $region8: #{tpu_custom_call.1} parent=1 // pred_region
      _
    $region9: #{tpu_custom_call.1} parent=1 // pred_fallthru
      _
    %v12 = vld [vmem:[%s0] sm:$0xff]
    %v13 = vld [vmem:[%s0 + $0x8] sm:$0xff]
    %v14 = vld [vmem:[%s1] sm:$0xff]
    %v15 = vld [vmem:[%s1 + $0x8] sm:$0xff]
    %v16 = vld [vmem:[%s1 + $0x10] sm:$0xff]
    %v17 = vld [vmem:[%s1 + $0x18] sm:$0xff]
    %vm18 = vcmask 261120
    %v20 = vsel %vm18, %v12, 0
    %v23 = vsel %vm18, %v13, 0
    %25 = vmatprep.subr.mxu0 0.0
    %v26 = vand.u32 %v14, 4294901760
    %27 = vmatpush1.msra.mxu0 %v26
    %28 = vmatprep.subr.mxu0 0.0
    %v29 = vand.u32 %v15, 4294901760
    %30 = vmatpush1.msra.mxu0 %v29
    %31 = vmatprep.subr.mxu0 0.0
    %v32 = vand.u32 %v16, 4294901760
    %33 = vmatpush1.msra.mxu0 %v32
    %34 = vmatprep.subr.mxu0 0.0
    %v35 = vand.u32 %v17, 4294901760
    %36 = vmatpush1.msra.mxu0 %v35
    %37 = vmatprep.subr.mxu0 0.0
    %38 = vmatpush1.msra.mxu0 0.0
    %39 = vmatprep.subr.mxu0 0.0
    %40 = vmatpush1.msra.mxu0 0.0
    %41 = vmatprep.subr.mxu0 0.0
    %42 = vmatpush1.msra.mxu0 0.0
    %43 = vmatprep.subr.mxu0 0.0
    %44 = vmatpush1.msra.mxu0 0.0
    %45 = vmatprep.subr.mxu0 0.0
    %46 = vmatpush1.msra.mxu0 0.0
    %47 = vmatprep.subr.mxu0 0.0
    %48 = vmatpush1.msra.mxu0 0.0
    %49 = vmatprep.subr.mxu0 0.0
    %50 = vmatpush1.msra.mxu0 0.0
    %51 = vmatprep.subr.mxu0 0.0
    %52 = vmatpush1.msra.mxu0 0.0
    %53 = vmatprep.subr.mxu0 0.0
    %54 = vmatpush1.msra.mxu0 0.0
    %55 = vmatprep.subr.mxu0 0.0
    %56 = vmatpush1.msra.mxu0 0.0
    %57 = vmatprep.subr.mxu0 0.0
    %58 = vmatpush1.msra.mxu0 0.0
    %59 = vmatprep.subr.mxu0 0.0
    %60 = vmatpush1.msra.mxu0 0.0
    %61 = vmatprep.subr.mxu0 0.0
    %62 = vmatpush1.msra.mxu0 0.0
    %63 = vmatprep.subr.mxu0 0.0
    %64 = vmatpush1.msra.mxu0 0.0
    %65 = vmatprep.subr.mxu0 0.0
    %66 = vmatpush1.msra.mxu0 0.0
    %67 = vmatprep.subr.mxu0 0.0
    %68 = vmatpush1.msra.mxu0 0.0
    %69 = vmatprep.subr.mxu0 0.0
    %70 = vmatpush1.msra.mxu0 0.0
    %71 = vmatprep.subr.mxu0 0.0
    %72 = vmatpush1.msra.mxu0 0.0
    %73 = vmatprep.subr.mxu0 0.0
    %74 = vmatpush1.msra.mxu0 0.0
    %75 = vmatprep.subr.mxu0 0.0
    %76 = vmatpush1.msra.mxu0 0.0
    %77 = vmatprep.subr.mxu0 0.0
    %78 = vmatpush1.msra.mxu0 0.0
    %79 = vmatprep.subr.mxu0 0.0
    %80 = vmatpush1.msra.mxu0 0.0
    %81 = vmatprep.subr.mxu0 0.0
    %82 = vmatpush1.msra.mxu0 0.0
    %83 = vmatprep.subr.mxu0 0.0
    %84 = vmatpush1.msra.mxu0 0.0
    %85 = vmatprep.subr.mxu0 0.0
    %86 = vmatpush1.msra.mxu0 0.0
    %87 = vmatprep.subr.mxu0 0.0
    %88 = vmatpush1.msra.mxu0 0.0
    %89 = vmatprep.subr.mxu0 0.0
    %90 = vmatpush1.msra.mxu0 0.0
    %91 = vmatprep.subr.mxu0 0.0
    %92 = vmatpush1.msra.mxu0 0.0
    %93 = vmatprep.mubr.f32.mxu0 0.0
    %v94 = vand.u32 %v20, 4294901760
    %v95 = vsub.f32 %v20, %v94
    %v96 = vand.u32 %v95, 4294901760
    %v97 = vsub.f32 %v95, %v96
    %v98 = vand.u32 %v97, 4294901760
    %99 = vmatmul.mubr.f32.gmra.mrb[0].mxu0 %v98
    %v100 = vpop.f32.mrb[0].mxu0
    %v101 = vadd.f32 0.0, %v100
    %v102 = vpop.f32.mrb[0].mxu0
    %103 = vmatprep.mubr.f32.mxu0 0.0
    %v104 = vand.u32 %v23, 4294901760
    %v105 = vsub.f32 %v23, %v104
    %v106 = vand.u32 %v105, 4294901760
    %v107 = vsub.f32 %v105, %v106
    %v108 = vand.u32 %v107, 4294901760
    %109 = vmatmul.mubr.f32.gmra.mrb[0].mxu0 %v108
    %v110 = vpop.f32.mrb[0].mxu0
    %v111 = vadd.f32 0.0, %v110
    %v112 = vpop.f32.mrb[0].mxu0
    %113 = vdwg.mxu0
    %114 = vmatprep.subr.mxu0 0.0
    %v115 = vand.u32 %v14, 4294901760
    %v116 = vsub.f32 %v14, %v115
    %v117 = vand.u32 %v116, 4294901760
    %v118 = vsub.f32 %v116, %v117
    %v119 = vand.u32 %v118, 4294901760
    %120 = vmatpush1.msra.mxu0 %v119
    %121 = vmatprep.subr.mxu0 0.0
    %v122 = vand.u32 %v15, 4294901760
    %v123 = vsub.f32 %v15, %v122
    %v124 = vand.u32 %v123, 4294901760
    %v125 = vsub.f32 %v123, %v124
    %v126 = vand.u32 %v125, 4294901760
    %127 = vmatpush1.msra.mxu0 %v126
    %128 = vmatprep.subr.mxu0 0.0
    %v129 = vand.u32 %v16, 4294901760
    %v130 = vsub.f32 %v16, %v129
    %v131 = vand.u32 %v130, 4294901760
    %v132 = vsub.f32 %v130, %v131
    %v133 = vand.u32 %v132, 4294901760
    %134 = vmatpush1.msra.mxu0 %v133
    %135 = vmatprep.subr.mxu0 0.0
    %v136 = vand.u32 %v17, 4294901760
    %v137 = vsub.f32 %v17, %v136
    %v138 = vand.u32 %v137, 4294901760
    %v139 = vsub.f32 %v137, %v138
    %v140 = vand.u32 %v139, 4294901760
    %141 = vmatpush1.msra.mxu0 %v140
    %142 = vmatprep.subr.mxu0 0.0
    %143 = vmatpush1.msra.mxu0 0.0
    %144 = vmatprep.subr.mxu0 0.0
    %145 = vmatpush1.msra.mxu0 0.0
    %146 = vmatprep.subr.mxu0 0.0
    %147 = vmatpush1.msra.mxu0 0.0
    %148 = vmatprep.subr.mxu0 0.0
    %149 = vmatpush1.msra.mxu0 0.0
    %150 = vmatprep.subr.mxu0 0.0
    %151 = vmatpush1.msra.mxu0 0.0
    %152 = vmatprep.subr.mxu0 0.0
    %153 = vmatpush1.msra.mxu0 0.0
    %154 = vmatprep.subr.mxu0 0.0
    %155 = vmatpush1.msra.mxu0 0.0
    %156 = vmatprep.subr.mxu0 0.0
    %157 = vmatpush1.msra.mxu0 0.0
    %158 = vmatprep.subr.mxu0 0.0
    %159 = vmatpush1.msra.mxu0 0.0
    %160 = vmatprep.subr.mxu0 0.0
    %161 = vmatpush1.msra.mxu0 0.0
    %162 = vmatprep.subr.mxu0 0.0
    %163 = vmatpush1.msra.mxu0 0.0
    %164 = vmatprep.subr.mxu0 0.0
    %165 = vmatpush1.msra.mxu0 0.0
    %166 = vmatprep.subr.mxu0 0.0
    %167 = vmatpush1.msra.mxu0 0.0
    %168 = vmatprep.subr.mxu0 0.0
    %169 = vmatpush1.msra.mxu0 0.0
    %170 = vmatprep.subr.mxu0 0.0
    %171 = vmatpush1.msra.mxu0 0.0
    %172 = vmatprep.subr.mxu0 0.0
    %173 = vmatpush1.msra.mxu0 0.0
    %174 = vmatprep.subr.mxu0 0.0
    %175 = vmatpush1.msra.mxu0 0.0
    %176 = vmatprep.subr.mxu0 0.0
    %177 = vmatpush1.msra.mxu0 0.0
    %178 = vmatprep.subr.mxu0 0.0
    %179 = vmatpush1.msra.mxu0 0.0
    %180 = vmatprep.subr.mxu0 0.0
    %181 = vmatpush1.msra.mxu0 0.0
    %182 = vmatprep.subr.mxu0 0.0
    %183 = vmatpush1.msra.mxu0 0.0
    %184 = vmatprep.subr.mxu0 0.0
    %185 = vmatpush1.msra.mxu0 0.0
    %186 = vmatprep.subr.mxu0 0.0
    %187 = vmatpush1.msra.mxu0 0.0
    %188 = vmatprep.subr.mxu0 0.0
    %189 = vmatpush1.msra.mxu0 0.0
    %190 = vmatprep.subr.mxu0 0.0
    %191 = vmatpush1.msra.mxu0 0.0
    %192 = vmatprep.subr.mxu0 0.0
    %193 = vmatpush1.msra.mxu0 0.0
    %194 = vmatprep.subr.mxu0 0.0
    %195 = vmatpush1.msra.mxu0 0.0
    %196 = vmatprep.subr.mxu0 0.0
    %197 = vmatpush1.msra.mxu0 0.0
    %198 = vmatprep.mubr.f32.mxu0 0.0
    %v199 = vand.u32 %v20, 4294901760
    %200 = vmatmul.mubr.f32.gmra.mrb[0].mxu0 %v199
    %v201 = vpop.f32.mrb[0].mxu0
    %v202 = vadd.f32 %v101, %v201
    %v203 = vpop.f32.mrb[0].mxu0
    %204 = vmatprep.mubr.f32.mxu0 0.0
    %v205 = vand.u32 %v23, 4294901760
    %206 = vmatmul.mubr.f32.gmra.mrb[0].mxu0 %v205
    %v207 = vpop.f32.mrb[0].mxu0
    %v208 = vadd.f32 %v111, %v207
    %v209 = vpop.f32.mrb[0].mxu0
    %210 = vdwg.mxu0
    %211 = vmatprep.subr.mxu0 0.0
    %v212 = vand.u32 %v14, 4294901760
    %v213 = vsub.f32 %v14, %v212
    %214 = vmatpush1.msra.mxu0 %v213
    %215 = vmatprep.subr.mxu0 0.0
    %v216 = vand.u32 %v15, 4294901760
    %v217 = vsub.f32 %v15, %v216
    %218 = vmatpush1.msra.mxu0 %v217
    %219 = vmatprep.subr.mxu0 0.0
    %v220 = vand.u32 %v16, 4294901760
    %v221 = vsub.f32 %v16, %v220
    %222 = vmatpush1.msra.mxu0 %v221
    %223 = vmatprep.subr.mxu0 0.0
    %v224 = vand.u32 %v17, 4294901760
    %v225 = vsub.f32 %v17, %v224
    %226 = vmatpush1.msra.mxu0 %v225
    %227 = vmatprep.subr.mxu0 0.0
    %228 = vmatpush1.msra.mxu0 0.0
    %229 = vmatprep.subr.mxu0 0.0
    %230 = vmatpush1.msra.mxu0 0.0
    %231 = vmatprep.subr.mxu0 0.0
    %232 = vmatpush1.msra.mxu0 0.0
    %233 = vmatprep.subr.mxu0 0.0
    %234 = vmatpush1.msra.mxu0 0.0
    %235 = vmatprep.subr.mxu0 0.0
    %236 = vmatpush1.msra.mxu0 0.0
    %237 = vmatprep.subr.mxu0 0.0
    %238 = vmatpush1.msra.mxu0 0.0
    %239 = vmatprep.subr.mxu0 0.0
    %240 = vmatpush1.msra.mxu0 0.0
    %241 = vmatprep.subr.mxu0 0.0
    %242 = vmatpush1.msra.mxu0 0.0
    %243 = vmatprep.subr.mxu0 0.0
    %244 = vmatpush1.msra.mxu0 0.0
    %245 = vmatprep.subr.mxu0 0.0
    %246 = vmatpush1.msra.mxu0 0.0
    %247 = vmatprep.subr.mxu0 0.0
    %248 = vmatpush1.msra.mxu0 0.0
    %249 = vmatprep.subr.mxu0 0.0
    %250 = vmatpush1.msra.mxu0 0.0
    %251 = vmatprep.subr.mxu0 0.0
    %252 = vmatpush1.msra.mxu0 0.0
    %253 = vmatprep.subr.mxu0 0.0
    %254 = vmatpush1.msra.mxu0 0.0
    %255 = vmatprep.subr.mxu0 0.0
    %256 = vmatpush1.msra.mxu0 0.0
    %257 = vmatprep.subr.mxu0 0.0
    %258 = vmatpush1.msra.mxu0 0.0
    %259 = vmatprep.subr.mxu0 0.0
    %260 = vmatpush1.msra.mxu0 0.0
    %261 = vmatprep.subr.mxu0 0.0
    %262 = vmatpush1.msra.mxu0 0.0
    %263 = vmatprep.subr.mxu0 0.0
    %264 = vmatpush1.msra.mxu0 0.0
    %265 = vmatprep.subr.mxu0 0.0
    %266 = vmatpush1.msra.mxu0 0.0
    %267 = vmatprep.subr.mxu0 0.0
    %268 = vmatpush1.msra.mxu0 0.0
    %269 = vmatprep.subr.mxu0 0.0
    %270 = vmatpush1.msra.mxu0 0.0
    %271 = vmatprep.subr.mxu0 0.0
    %272 = vmatpush1.msra.mxu0 0.0
    %273 = vmatprep.subr.mxu0 0.0
    %274 = vmatpush1.msra.mxu0 0.0
    %275 = vmatprep.subr.mxu0 0.0
    %276 = vmatpush1.msra.mxu0 0.0
    %277 = vmatprep.subr.mxu0 0.0
    %278 = vmatpush1.msra.mxu0 0.0
    %279 = vmatprep.subr.mxu0 0.0
    %280 = vmatpush1.msra.mxu0 0.0
    %281 = vmatprep.subr.mxu0 0.0
    %282 = vmatpush1.msra.mxu0 0.0
    %283 = vmatprep.mubr.f32.mxu0 0.0
    %v284 = vand.u32 %v20, 4294901760
    %v285 = vsub.f32 %v20, %v284
    %286 = vmatmul.mubr.f32.gmra.mrb[0].mxu0 %v285
    %v287 = vpop.f32.mrb[0].mxu0
    %v288 = vadd.f32 %v202, %v287
    %v289 = vpop.f32.mrb[0].mxu0
    %290 = vmatprep.mubr.f32.mxu0 0.0
    %v291 = vand.u32 %v23, 4294901760
    %v292 = vsub.f32 %v23, %v291
    %293 = vmatmul.mubr.f32.gmra.mrb[0].mxu0 %v292
    %v294 = vpop.f32.mrb[0].mxu0
    %v295 = vadd.f32 %v208, %v294
    %v296 = vpop.f32.mrb[0].mxu0
    %297 = vdwg.mxu0
    %298 = vmatprep.subr.mxu0 0.0
    %v299 = vand.u32 %v14, 4294901760
    %300 = vmatpush1.msra.mxu0 %v299
    %301 = vmatprep.subr.mxu0 0.0
    %v302 = vand.u32 %v15, 4294901760
    %303 = vmatpush1.msra.mxu0 %v302
    %304 = vmatprep.subr.mxu0 0.0
    %v305 = vand.u32 %v16, 4294901760
    %306 = vmatpush1.msra.mxu0 %v305
    %307 = vmatprep.subr.mxu0 0.0
    %v308 = vand.u32 %v17, 4294901760
    %309 = vmatpush1.msra.mxu0 %v308
    %310 = vmatprep.subr.mxu0 0.0
    %311 = vmatpush1.msra.mxu0 0.0
    %312 = vmatprep.subr.mxu0 0.0
    %313 = vmatpush1.msra.mxu0 0.0
    %314 = vmatprep.subr.mxu0 0.0
    %315 = vmatpush1.msra.mxu0 0.0
    %316 = vmatprep.subr.mxu0 0.0
    %317 = vmatpush1.msra.mxu0 0.0
    %318 = vmatprep.subr.mxu0 0.0
    %319 = vmatpush1.msra.mxu0 0.0
    %320 = vmatprep.subr.mxu0 0.0
    %321 = vmatpush1.msra.mxu0 0.0
    %322 = vmatprep.subr.mxu0 0.0
    %323 = vmatpush1.msra.mxu0 0.0
    %324 = vmatprep.subr.mxu0 0.0
    %325 = vmatpush1.msra.mxu0 0.0
    %326 = vmatprep.subr.mxu0 0.0
    %327 = vmatpush1.msra.mxu0 0.0
    %328 = vmatprep.subr.mxu0 0.0
    %329 = vmatpush1.msra.mxu0 0.0
    %330 = vmatprep.subr.mxu0 0.0
    %331 = vmatpush1.msra.mxu0 0.0
    %332 = vmatprep.subr.mxu0 0.0
    %333 = vmatpush1.msra.mxu0 0.0
    %334 = vmatprep.subr.mxu0 0.0
    %335 = vmatpush1.msra.mxu0 0.0
    %336 = vmatprep.subr.mxu0 0.0
    %337 = vmatpush1.msra.mxu0 0.0
    %338 = vmatprep.subr.mxu0 0.0
    %339 = vmatpush1.msra.mxu0 0.0
    %340 = vmatprep.subr.mxu0 0.0
    %341 = vmatpush1.msra.mxu0 0.0
    %342 = vmatprep.subr.mxu0 0.0
    %343 = vmatpush1.msra.mxu0 0.0
    %344 = vmatprep.subr.mxu0 0.0
    %345 = vmatpush1.msra.mxu0 0.0
    %346 = vmatprep.subr.mxu0 0.0
    %347 = vmatpush1.msra.mxu0 0.0
    %348 = vmatprep.subr.mxu0 0.0
    %349 = vmatpush1.msra.mxu0 0.0
    %350 = vmatprep.subr.mxu0 0.0
    %351 = vmatpush1.msra.mxu0 0.0
    %352 = vmatprep.subr.mxu0 0.0
    %353 = vmatpush1.msra.mxu0 0.0
    %354 = vmatprep.subr.mxu0 0.0
    %355 = vmatpush1.msra.mxu0 0.0
    %356 = vmatprep.subr.mxu0 0.0
    %357 = vmatpush1.msra.mxu0 0.0
    %358 = vmatprep.subr.mxu0 0.0
    %359 = vmatpush1.msra.mxu0 0.0
    %360 = vmatprep.subr.mxu0 0.0
    %361 = vmatpush1.msra.mxu0 0.0
    %362 = vmatprep.subr.mxu0 0.0
    %363 = vmatpush1.msra.mxu0 0.0
    %364 = vmatprep.subr.mxu0 0.0
    %365 = vmatpush1.msra.mxu0 0.0
    %366 = vmatprep.mubr.f32.mxu0 0.0
    %v367 = vand.u32 %v20, 4294901760
    %v368 = vsub.f32 %v20, %v367
    %v369 = vand.u32 %v368, 4294901760
    %370 = vmatmul.mubr.f32.gmra.mrb[0].mxu0 %v369
    %v371 = vpop.f32.mrb[0].mxu0
    %v372 = vadd.f32 %v288, %v371
    %v373 = vpop.f32.mrb[0].mxu0
    %374 = vmatprep.mubr.f32.mxu0 0.0
    %v375 = vand.u32 %v23, 4294901760
    %v376 = vsub.f32 %v23, %v375
    %v377 = vand.u32 %v376, 4294901760
    %378 = vmatmul.mubr.f32.gmra.mrb[0].mxu0 %v377
    %v379 = vpop.f32.mrb[0].mxu0
    %v380 = vadd.f32 %v295, %v379
    %v381 = vpop.f32.mrb[0].mxu0
    %382 = vdwg.mxu0
    %383 = vmatprep.subr.mxu0 0.0
    %v384 = vand.u32 %v14, 4294901760
    %v385 = vsub.f32 %v14, %v384
    %v386 = vand.u32 %v385, 4294901760
    %387 = vmatpush1.msra.mxu0 %v386
    %388 = vmatprep.subr.mxu0 0.0
    %v389 = vand.u32 %v15, 4294901760
    %v390 = vsub.f32 %v15, %v389
    %v391 = vand.u32 %v390, 4294901760
    %392 = vmatpush1.msra.mxu0 %v391
    %393 = vmatprep.subr.mxu0 0.0
    %v394 = vand.u32 %v16, 4294901760
    %v395 = vsub.f32 %v16, %v394
    %v396 = vand.u32 %v395, 4294901760
    %397 = vmatpush1.msra.mxu0 %v396
    %398 = vmatprep.subr.mxu0 0.0
    %v399 = vand.u32 %v17, 4294901760
    %v400 = vsub.f32 %v17, %v399
    %v401 = vand.u32 %v400, 4294901760
    %402 = vmatpush1.msra.mxu0 %v401
    %403 = vmatprep.subr.mxu0 0.0
    %404 = vmatpush1.msra.mxu0 0.0
    %405 = vmatprep.subr.mxu0 0.0
    %406 = vmatpush1.msra.mxu0 0.0
    %407 = vmatprep.subr.mxu0 0.0
    %408 = vmatpush1.msra.mxu0 0.0
    %409 = vmatprep.subr.mxu0 0.0
    %410 = vmatpush1.msra.mxu0 0.0
    %411 = vmatprep.subr.mxu0 0.0
    %412 = vmatpush1.msra.mxu0 0.0
    %413 = vmatprep.subr.mxu0 0.0
    %414 = vmatpush1.msra.mxu0 0.0
    %415 = vmatprep.subr.mxu0 0.0
    %416 = vmatpush1.msra.mxu0 0.0
    %417 = vmatprep.subr.mxu0 0.0
    %418 = vmatpush1.msra.mxu0 0.0
    %419 = vmatprep.subr.mxu0 0.0
    %420 = vmatpush1.msra.mxu0 0.0
    %421 = vmatprep.subr.mxu0 0.0
    %422 = vmatpush1.msra.mxu0 0.0
    %423 = vmatprep.subr.mxu0 0.0
    %424 = vmatpush1.msra.mxu0 0.0
    %425 = vmatprep.subr.mxu0 0.0
    %426 = vmatpush1.msra.mxu0 0.0
    %427 = vmatprep.subr.mxu0 0.0
    %428 = vmatpush1.msra.mxu0 0.0
    %429 = vmatprep.subr.mxu0 0.0
    %430 = vmatpush1.msra.mxu0 0.0
    %431 = vmatprep.subr.mxu0 0.0
    %432 = vmatpush1.msra.mxu0 0.0
    %433 = vmatprep.subr.mxu0 0.0
    %434 = vmatpush1.msra.mxu0 0.0
    %435 = vmatprep.subr.mxu0 0.0
    %436 = vmatpush1.msra.mxu0 0.0
    %437 = vmatprep.subr.mxu0 0.0
    %438 = vmatpush1.msra.mxu0 0.0
    %439 = vmatprep.subr.mxu0 0.0
    %440 = vmatpush1.msra.mxu0 0.0
    %441 = vmatprep.subr.mxu0 0.0
    %442 = vmatpush1.msra.mxu0 0.0
    %443 = vmatprep.subr.mxu0 0.0
    %444 = vmatpush1.msra.mxu0 0.0
    %445 = vmatprep.subr.mxu0 0.0
    %446 = vmatpush1.msra.mxu0 0.0
    %447 = vmatprep.subr.mxu0 0.0
    %448 = vmatpush1.msra.mxu0 0.0
    %449 = vmatprep.subr.mxu0 0.0
    %450 = vmatpush1.msra.mxu0 0.0
    %451 = vmatprep.subr.mxu0 0.0
    %452 = vmatpush1.msra.mxu0 0.0
    %453 = vmatprep.subr.mxu0 0.0
    %454 = vmatpush1.msra.mxu0 0.0
    %455 = vmatprep.subr.mxu0 0.0
    %456 = vmatpush1.msra.mxu0 0.0
    %457 = vmatprep.subr.mxu0 0.0
    %458 = vmatpush1.msra.mxu0 0.0
    %459 = vmatprep.mubr.f32.mxu0 0.0
    %v460 = vand.u32 %v20, 4294901760
    %461 = vmatmul.mubr.f32.gmra.mrb[0].mxu0 %v460
    %v462 = vpop.f32.mrb[0].mxu0
    %v463 = vadd.f32 %v372, %v462
    %v464 = vpop.f32.mrb[0].mxu0
    %465 = vmatprep.mubr.f32.mxu0 0.0
    %v466 = vand.u32 %v23, 4294901760
    %467 = vmatmul.mubr.f32.gmra.mrb[0].mxu0 %v466
    %v468 = vpop.f32.mrb[0].mxu0
    %v469 = vadd.f32 %v380, %v468
    %v470 = vpop.f32.mrb[0].mxu0
    %471 = vdwg.mxu0
    %472 = vmatprep.subr.mxu0 0.0
    %v473 = vand.u32 %v14, 4294901760
    %474 = vmatpush1.msra.mxu0 %v473
    %475 = vmatprep.subr.mxu0 0.0
    %v476 = vand.u32 %v15, 4294901760
    %477 = vmatpush1.msra.mxu0 %v476
    %478 = vmatprep.subr.mxu0 0.0
    %v479 = vand.u32 %v16, 4294901760
    %480 = vmatpush1.msra.mxu0 %v479
    %481 = vmatprep.subr.mxu0 0.0
    %v482 = vand.u32 %v17, 4294901760
    %483 = vmatpush1.msra.mxu0 %v482
    %484 = vmatprep.subr.mxu0 0.0
    %485 = vmatpush1.msra.mxu0 0.0
    %486 = vmatprep.subr.mxu0 0.0
    %487 = vmatpush1.msra.mxu0 0.0
    %488 = vmatprep.subr.mxu0 0.0
    %489 = vmatpush1.msra.mxu0 0.0
    %490 = vmatprep.subr.mxu0 0.0
    %491 = vmatpush1.msra.mxu0 0.0
    %492 = vmatprep.subr.mxu0 0.0
    %493 = vmatpush1.msra.mxu0 0.0
    %494 = vmatprep.subr.mxu0 0.0
    %495 = vmatpush1.msra.mxu0 0.0
    %496 = vmatprep.subr.mxu0 0.0
    %497 = vmatpush1.msra.mxu0 0.0
    %498 = vmatprep.subr.mxu0 0.0
    %499 = vmatpush1.msra.mxu0 0.0
    %500 = vmatprep.subr.mxu0 0.0
    %501 = vmatpush1.msra.mxu0 0.0
    %502 = vmatprep.subr.mxu0 0.0
    %503 = vmatpush1.msra.mxu0 0.0
    %504 = vmatprep.subr.mxu0 0.0
    %505 = vmatpush1.msra.mxu0 0.0
    %506 = vmatprep.subr.mxu0 0.0
    %507 = vmatpush1.msra.mxu0 0.0
    %508 = vmatprep.subr.mxu0 0.0
    %509 = vmatpush1.msra.mxu0 0.0
    %510 = vmatprep.subr.mxu0 0.0
    %511 = vmatpush1.msra.mxu0 0.0
    %512 = vmatprep.subr.mxu0 0.0
    %513 = vmatpush1.msra.mxu0 0.0
    %514 = vmatprep.subr.mxu0 0.0
    %515 = vmatpush1.msra.mxu0 0.0
    %516 = vmatprep.subr.mxu0 0.0
    %517 = vmatpush1.msra.mxu0 0.0
    %518 = vmatprep.subr.mxu0 0.0
    %519 = vmatpush1.msra.mxu0 0.0
    %520 = vmatprep.subr.mxu0 0.0
    %521 = vmatpush1.msra.mxu0 0.0
    %522 = vmatprep.subr.mxu0 0.0
    %523 = vmatpush1.msra.mxu0 0.0
    %524 = vmatprep.subr.mxu0 0.0
    %525 = vmatpush1.msra.mxu0 0.0
    %526 = vmatprep.subr.mxu0 0.0
    %527 = vmatpush1.msra.mxu0 0.0
    %528 = vmatprep.subr.mxu0 0.0
    %529 = vmatpush1.msra.mxu0 0.0
    %530 = vmatprep.subr.mxu0 0.0
    %531 = vmatpush1.msra.mxu0 0.0
    %532 = vmatprep.subr.mxu0 0.0
    %533 = vmatpush1.msra.mxu0 0.0
    %534 = vmatprep.subr.mxu0 0.0
    %535 = vmatpush1.msra.mxu0 0.0
    %536 = vmatprep.subr.mxu0 0.0
    %537 = vmatpush1.msra.mxu0 0.0
    %538 = vmatprep.subr.mxu0 0.0
    %539 = vmatpush1.msra.mxu0 0.0
    %540 = vmatprep.mubr.f32.mxu0 0.0
    %v541 = vand.u32 %v20, 4294901760
    %542 = vmatmul.mubr.f32.gmra.mrb[0].mxu0 %v541
    %v543 = vpop.f32.mrb[0].mxu0
    %v544 = vadd.f32 %v463, %v543
    %v545 = vpop.f32.mrb[0].mxu0
    %546 = vmatprep.mubr.f32.mxu0 0.0
    %v547 = vand.u32 %v23, 4294901760
    %548 = vmatmul.mubr.f32.gmra.mrb[0].mxu0 %v547
    %v549 = vpop.f32.mrb[0].mxu0
    %v550 = vadd.f32 %v469, %v549
    %v551 = vpop.f32.mrb[0].mxu0
    %552 = vdwg.mxu0
    %554 = vset.pattern.permute.xlu0 0
    %555 = vperm.xlu0 %554, %v544
    %v556 = vpop.permute.xlu0 %555
    %559 = vset.pattern.permute.xlu0 0
    %560 = vperm.xlu0 %559, %v550
    %v561 = vpop.permute.xlu0 %560
    %v563 = vsub.f32 %v12, %v556
    %v564 = vsub.f32 %v13, %v561
    %v565 = vmul.f32 %v563, %v563
    %v566 = vmul.f32 %v564, %v564
    %v567 = vsel %vm18, %v565, 0.0
    %568 = vadd.xlane.f32.xlu0 %v567
    %v569 = vpop.xlane.xlu0 %568
    %v570 = vsel %vm18, %v566, 0.0
    %571 = vadd.xlane.f32.xlu0 %v570
    %v572 = vpop.xlane.xlu0 %571
    %v573 = vrcp.pop 32.0
    %v574 = vmul.f32 %v569, %v573
    %v575 = vmul.f32 %v572, %v573
    %v576 = vadd.f32 %v574, 1e-05
    %v577 = vadd.f32 %v575, 1e-05
    %v578 = vrsqrt.pop %v576
    %v579 = vrsqrt.pop %v577
    %v580 = vmul.f32 %v578, %v544
    %v581 = vmul.f32 %v579, %v550
    %vm582 = vcmask 15368
    %v583 = vsel %vm582, %v580, -inf
    %v584 = vrot.slane %v583, 4
    %v585 = vmax.f32 %v583, %v584
    %v586 = vrot.slane %v585, 2
    %v587 = vmax.f32 %v585, %v586
    %v588 = vrot.slane %v587, 1
    %v589 = vmax.f32 %v587, %v588
    %v590 = vsel %vm582, %v581, -inf
    %v591 = vrot.slane %v590, 4
    %v592 = vmax.f32 %v590, %v591
    %v593 = vrot.slane %v592, 2
    %v594 = vmax.f32 %v592, %v593
    %v595 = vrot.slane %v594, 1
    %v596 = vmax.f32 %v594, %v595
    %v597 = vsub.f32 %v580, %v589
    %v598 = vsub.f32 %v581, %v596
    %v599 = vmul.f32 %v597, 1.442695
    %v600 = vpow.pop %v599
    %v601 = vmul.f32 %v598, 1.442695
    %v602 = vpow.pop %v601
    %v603 = vsel %vm582, %v600, 0.0
    %v604 = vrot.slane %v603, 4
    %v605 = vadd.f32 %v603, %v604
    %v606 = vrot.slane %v605, 2
    %v607 = vadd.f32 %v605, %v606
    %v608 = vrot.slane %v607, 1
    %v609 = vadd.f32 %v607, %v608
    %v610 = vsel %vm582, %v602, 0.0
    %v611 = vrot.slane %v610, 4
    %v612 = vadd.f32 %v610, %v611
    %v613 = vrot.slane %v612, 2
    %v614 = vadd.f32 %v612, %v613
    %v615 = vrot.slane %v614, 1
    %v616 = vadd.f32 %v614, %v615
    %618 = vset.pattern.permute.xlu0 1
    %619 = vperm.xlu0 %618, %v600
    %v620 = vpop.permute.xlu0 %619
    %623 = vset.pattern.permute.xlu0 1
    %624 = vperm.xlu0 %623, %v602
    %v625 = vpop.permute.xlu0 %624
    %v627 = vmul.f32 %v620, %v12
    %v628 = vmul.f32 %v625, %v13
    %v629 = vsel %vm18, %v627, 0.0
    %v630 = vrot.slane %v629, 4
    %v631 = vadd.f32 %v629, %v630
    %v632 = vrot.slane %v631, 2
    %v633 = vadd.f32 %v631, %v632
    %v634 = vrot.slane %v633, 1
    %v635 = vadd.f32 %v633, %v634
    %v636 = vsel %vm18, %v628, 0.0
    %v637 = vrot.slane %v636, 4
    %v638 = vadd.f32 %v636, %v637
    %v639 = vrot.slane %v638, 2
    %v640 = vadd.f32 %v638, %v639
    %v641 = vrot.slane %v640, 1
    %v642 = vadd.f32 %v640, %v641
    %644 = vset.pattern.permute.xlu0 1
    %645 = vperm.xlu0 %644, %v609
    %v646 = vpop.permute.xlu0 %645
    %649 = vset.pattern.permute.xlu0 1
    %650 = vperm.xlu0 %649, %v616
    %v651 = vpop.permute.xlu0 %650
    %v653 = vrcp.pop %v646
    %v654 = vmul.f32 %v635, %v653
    %v655 = vrcp.pop %v651
    %v656 = vmul.f32 %v642, %v655
    %vm659 = vcmask 1041409
    %v660 = vsel %vm659, %v656, %v654
    %vm662 = vcmask 254976
    %663 = vst.msk [vmem:[#allocation2] sm:$0x3] %vm662, %v660
    // Predicated region
    $region10: #{tpu_custom_call.1} parent=1 // pred_check
      _
    $region11: #{tpu_custom_call.1} parent=1 // pred_check_branch
      %665 = sbr.rel (0) target = $region13
    $region12: #{tpu_custom_call.1} parent=1 // pred_region
      %s667 = ssub.s32 32, 32
      %668 = vsyncadd [#allocation3], %s667
      %s670 = sshll.u32 [#allocation2], 4
      %s671 = int_to_ptr.vmem [resolvable:$true] %s670
      %673 = dma.vmem_to_hbm [thread:$0]  %s671, 32, %s2, [#allocation3]
    $region13: #{tpu_custom_call.1} parent=1 // pred_fallthru
      _
    // Predicated region
    $region14: #{tpu_custom_call.1} parent=1 // pred_check
      _
    $region15: #{tpu_custom_call.1} parent=1 // pred_check_branch
      %675 = sbr.rel (0) target = $region17
    $region16: #{tpu_custom_call.1} parent=1 // pred_region
      %676 = dma.done [#allocation3], 32
    $region17: #{tpu_custom_call.1} parent=1 // pred_fallthru
      _
    %677 = vsyncpa [#allocation3], 1

</llo_original>
